<compile_context>
chip_gen: v7x
topology: tpu7x:2x2x1
jax: 0.10.0
libtpu: 0.0.40
codegen_flags: <defaults>
</compile_context>

<pallas_src>
import functools

import jax
import jax.numpy as jnp
from jax.experimental import pallas as pl
from jax.experimental.pallas import tpu as pltpu

_HP = jax.lax.Precision.HIGHEST


# ----------------------------------------------------------------------------
# Mode A: small feature maps — several whole images per grid step.
# ----------------------------------------------------------------------------
def _ca_batched_kernel(x_ref, w1_ref, w2_ref, o_ref, *, hw_total, bt):
    # x_ref: (bt, C, HW)   w1: (C, Ch)   w2: (Ch, C)   o_ref: (bt, 1, C)
    x = x_ref[...].astype(jnp.float32)                       # small block; cheap
    avg = jnp.sum(x, axis=-1) * (1.0 / hw_total)             # (bt, C)
    mx = jnp.max(x, axis=-1)                                 # (bt, C)

    p = jnp.concatenate([avg, mx], axis=0)                   # (2*bt, C)
    w1 = w1_ref[...].astype(jnp.float32)
    w2 = w2_ref[...].astype(jnp.float32)
    h = jnp.maximum(
        jnp.dot(p, w1, preferred_element_type=jnp.float32, precision=_HP), 0.0)
    out = jnp.dot(h, w2, preferred_element_type=jnp.float32, precision=_HP)
    sig = jax.nn.sigmoid(out[:bt] + out[bt:])                # (bt, C)

    # bt <= 8, so this unrolls into a handful of (1, C) stores.
    for i in range(bt):
        o_ref[i] = sig[i:i + 1, :]


# ----------------------------------------------------------------------------
# Mode B: large feature maps — stream spatial tiles with running accumulators.
# ----------------------------------------------------------------------------
def _ca_stream_kernel(x_ref, w1_ref, w2_ref, o_ref, sum_acc, max_acc, *,
                      hw_total, hw_tile, mask_tail, use_mxu_sum):
    # x_ref block: (1, C, hw_tile)   o_ref block: (1, 1, C)
    # sum_acc / max_acc: (C, 1) fp32 VMEM scratch
    t = pl.program_id(1)
    n_t = pl.num_programs(1)

    @pl.when(t == 0)
    def _init():
        sum_acc[...] = jnp.zeros_like(sum_acc)
        max_acc[...] = jnp.full_like(max_acc, -jnp.inf)

    x = x_ref[0]                                              # (C, hw_tile), input dtype

    def _accumulate(x_sum, x_max):
        if use_mxu_sum:
            # Sum-pool on the (otherwise idle) MXU; fp32 accumulation.
            ones = jnp.ones((x_sum.shape[-1], 1), dtype=x_sum.dtype)
            sum_acc[...] += jnp.dot(x_sum, ones,
                                    preferred_element_type=jnp.float32)
        else:
            sum_acc[...] += jnp.sum(x_sum.astype(jnp.float32), axis=-1,
                                    keepdims=True)
        # Max-pool in the input dtype; only the (C, 1) result is cast.
        tile_max = jnp.max(x_max, axis=-1, keepdims=True).astype(jnp.float32)
        max_acc[...] = jnp.maximum(max_acc[...], tile_max)

    if mask_tail:
        # Only the LAST spatial tile can contain padded/out-of-range lanes;
        # keep the hot streaming path mask-free.
        @pl.when(t < n_t - 1)
        def _full_tile():
            _accumulate(x, x)

        @pl.when(t == n_t - 1)
        def _tail_tile():
            lane = jax.lax.broadcasted_iota(jnp.int32, x.shape, 1)
            valid = (t * hw_tile + lane) < hw_total
            zero = jnp.zeros((), dtype=x.dtype)
            neg = jnp.asarray(-jnp.inf, dtype=x.dtype)
            _accumulate(jnp.where(valid, x, zero), jnp.where(valid, x, neg))
    else:
        _accumulate(x, x)

    @pl.when(t == n_t - 1)
    def _finalize():
        avg = sum_acc[...] * (1.0 / hw_total)                 # (C, 1) fp32 mean
        pc = jnp.concatenate([avg, max_acc[...]], axis=1)     # (C, 2)
        w1 = w1_ref[...].astype(jnp.float32)
        w2 = w2_ref[...].astype(jnp.float32)
        # pc^T @ w1 as one dot_general (trans_a), avoiding an explicit transpose.
        h = jax.lax.dot_general(pc, w1,
                                dimension_numbers=(((0,), (0,)), ((), ())),
                                preferred_element_type=jnp.float32,
                                precision=_HP)                # (2, Ch)
        h = jnp.maximum(h, 0.0)
        out = jnp.dot(h, w2, preferred_element_type=jnp.float32,
                      precision=_HP)                          # (2, C)
        o_ref[0] = jax.nn.sigmoid(out[0:1] + out[1:2])        # (1, C)


# ----------------------------------------------------------------------------
# Wrapper
# ----------------------------------------------------------------------------
def _vmem_budget_bytes():
    """Conservative scoped-VMEM budget derived from the physical VMEM size."""
    try:
        cap = pltpu.get_tpu_info().vmem_capacity_bytes
    except Exception:
        cap = 64 * 1024 * 1024            # assume the smallest (v7x) if unknown
    return int(min((cap * 3) // 4, 96 * 1024 * 1024))   # 48 MiB v7x, 96 MiB v5e/v6e


def channel_attention(x_nchw, w1_t, w2_t, *, max_tile_bytes=None):
    """x_nchw: (B, C, H, W); w1_t: (C, C//ratio); w2_t: (C//ratio, C).
    Returns sigmoid(fc2(relu(fc1(avg))) + fc2(relu(fc1(max)))) as (B, C, 1, 1) fp32."""
    B, C, H, W = x_nchw.shape
    HW = H * W
    Ch = w1_t.shape[1]
    x = x_nchw.reshape(B, C, HW)                   # free, contiguous reshape
    elem = jnp.dtype(x.dtype).itemsize

    vmem_budget = _vmem_budget_bytes()
    if max_tile_bytes is None:
        # Largest x block whose double-buffer (plus weights/scratch) fits
        # comfortably: ~8 MiB on v7x, ~16 MiB on v5e/v6e.
        max_tile_bytes = max(2 * 1024 * 1024,
                             min(16 * 1024 * 1024, vmem_budget // 6))
    vmem_limit = int(min(vmem_budget,
                         max(16 * 1024 * 1024, 3 * max_tile_bytes + (4 << 20))))

    w_bytes = (C * Ch + Ch * C) * jnp.dtype(w1_t.dtype).itemsize
    cost = pl.CostEstimate(
        flops=B * (3 * C * HW + 8 * C * Ch),
        transcendentals=B * C,
        bytes_accessed=B * C * HW * elem + w_bytes + B * C * 4,
    )

    bytes_per_image = C * HW * elem

    if bytes_per_image <= max_tile_bytes:
        # ---- Mode A: whole image(s) per block; batch up to 8 images/step. ----
        bt = int(min(B, 8, max(1, max_tile_bytes // bytes_per_image)))
        kernel = functools.partial(_ca_batched_kernel, hw_total=HW, bt=bt)
        out = pl.pallas_call(
            kernel,
            out_shape=jax.ShapeDtypeStruct((B, 1, C), jnp.float32),
            grid_spec=pltpu.PrefetchScalarGridSpec(
                num_scalar_prefetch=0,
                grid=(pl.cdiv(B, bt),),
                in_specs=[
                    pl.BlockSpec((bt, C, HW), lambda i: (i, 0, 0)),
                    pl.BlockSpec((C, Ch), lambda i: (0, 0)),
                    pl.BlockSpec((Ch, C), lambda i: (0, 0)),
                ],
                out_specs=pl.BlockSpec((bt, 1, C), lambda i: (i, 0, 0)),
            ),
            compiler_params=pltpu.CompilerParams(
                dimension_semantics=("parallel",),
                vmem_limit_bytes=vmem_limit,
            ),
            cost_estimate=cost,
        )(x, w1_t, w2_t)
    else:
        # ---- Mode B: stream spatial tiles; accumulate sum/max in VMEM. ----
        max_lanes = max(128, (max_tile_bytes // (elem * C)) // 128 * 128)
        if HW <= max_lanes:
            hw_tile, n_t = HW, 1
        else:
            hw_tile, n_t = max_lanes, pl.cdiv(HW, max_lanes)
        mask_tail = (HW % hw_tile) != 0
        use_mxu_sum = jnp.dtype(x.dtype) != jnp.dtype(jnp.float32)

        kernel = functools.partial(_ca_stream_kernel, hw_total=HW,
                                   hw_tile=hw_tile, mask_tail=mask_tail,
                                   use_mxu_sum=use_mxu_sum)
        out = pl.pallas_call(
            kernel,
            out_shape=jax.ShapeDtypeStruct((B, 1, C), jnp.float32),
            grid_spec=pltpu.PrefetchScalarGridSpec(
                num_scalar_prefetch=0,
                grid=(B, n_t),
                in_specs=[
                    pl.BlockSpec((1, C, hw_tile), lambda b, t: (b, 0, t)),
                    pl.BlockSpec((C, Ch), lambda b, t: (0, 0)),
                    pl.BlockSpec((Ch, C), lambda b, t: (0, 0)),
                ],
                out_specs=pl.BlockSpec((1, 1, C), lambda b, t: (b, 0, 0)),
                scratch_shapes=[pltpu.VMEM((C, 1), jnp.float32),
                                pltpu.VMEM((C, 1), jnp.float32)],
            ),
            compiler_params=pltpu.CompilerParams(
                dimension_semantics=("parallel", "arbitrary"),
                vmem_limit_bytes=vmem_limit,
            ),
            cost_estimate=cost,
        )(x, w1_t, w2_t)

    return out.reshape(B, C, 1, 1)


def reference(x_nchw, w1_t, w2_t):
    """Pure-JAX reference implementing the PyTorch semantics (fp32 math)."""
    xf = x_nchw.astype(jnp.float32)
    avg = jnp.mean(xf, axis=(2, 3))                # (B, C)
    mx = jnp.max(xf, axis=(2, 3))                  # (B, C)
    w1 = w1_t.astype(jnp.float32)
    w2 = w2_t.astype(jnp.float32)

    def mlp(p):
        h = jnp.maximum(jnp.dot(p, w1, precision=_HP), 0.0)
        return jnp.dot(h, w2, precision=_HP)

    return jax.nn.sigmoid(mlp(avg) + mlp(mx))[:, :, None, None]


if __name__ == "__main__":
    key = jax.random.PRNGKey(0)
    k_x, k_w1, k_w2, k_x2 = jax.random.split(key, 4)

    B, C, H, W = 2, 64, 16, 16                     # in_planes=64 -> hidden=64//16=4
    Ch = C // 16

    x = jax.random.normal(k_x, (B, C, H, W), dtype=jnp.float32)
    # PyTorch fc1 weight is (Ch, C, 1, 1); fc2 weight is (C, Ch, 1, 1).
    # Store transposed 2-D versions for the kernel's row-vector matmuls.
    w1_torch = jax.random.normal(k_w1, (Ch, C), dtype=jnp.float32) * 0.1
    w2_torch = jax.random.normal(k_w2, (C, Ch), dtype=jnp.float32) * 0.1
    w1_t = w1_torch.T                              # (C, Ch)
    w2_t = w2_torch.T                              # (Ch, C)

    # 1) Default path (small feature map -> batched mode).
    y = channel_attention(x, w1_t, w2_t)
    jax.block_until_ready(y)
    y_ref = reference(x, w1_t, w2_t)
    assert y.shape == (B, C, 1, 1)
    assert jnp.allclose(y, y_ref, atol=1e-5, rtol=1e-5), "mismatch (batched path)"

    # 2) Streaming + tail-mask path: HW=196 with a forced tiny tile (fp32).
    x2 = jax.random.normal(k_x2, (B, C, 14, 14), dtype=jnp.float32)
    y2 = channel_attention(x2, w1_t, w2_t, max_tile_bytes=32 * 1024)
    jax.block_until_ready(y2)
    y2_ref = reference(x2, w1_t, w2_t)
    assert jnp.allclose(y2, y2_ref, atol=1e-5, rtol=1e-5), "mismatch (stream fp32)"

    # 3) bf16 streaming path (MXU sum-pool, max in bf16), forced tiny tile.
    x3 = x2.astype(jnp.bfloat16)
    y3 = channel_attention(x3, w1_t, w2_t, max_tile_bytes=16 * 1024)
    jax.block_until_ready(y3)
    y3_ref = reference(x3, w1_t, w2_t)
    assert jnp.allclose(y3, y3_ref, atol=5e-4, rtol=5e-4), "mismatch (stream bf16)"

    print("KERNEL_OK")
</pallas_src>

<mosaic_0001>
module attributes {stable_mosaic.version = 11 : i64} {
  func.func @_ca_batched_kernel(%arg0: i32, %arg1: memref<2x64x256xf32, #tpu.memory_space<vmem>>, %arg2: memref<64x4xf32, #tpu.memory_space<vmem>>, %arg3: memref<4x64xf32, #tpu.memory_space<vmem>>, %arg4: memref<2x1x64xf32, #tpu.memory_space<vmem>>) attributes {dimension_semantics = [#tpu.dimension_semantics<parallel>], iteration_bounds = array<i64: 1>, scalar_prefetch = 0 : i64, scratch_operands = 0 : i64, tpu.core_type = #tpu.core_type<tc>, window_params = [{transform_indices = @transform_0, window_bounds = array<i64: 2, 64, 256>}, {pipeline_mode = #tpu.pipeline_mode<synchronous>, transform_indices = @transform_1, window_bounds = array<i64: 64, 4>}, {pipeline_mode = #tpu.pipeline_mode<synchronous>, transform_indices = @transform_2, window_bounds = array<i64: 4, 64>}, {transform_indices = @transform_3, window_bounds = array<i64: 2, 1, 64>}]} {
    %c0 = arith.constant 0 : index
    %c0_0 = arith.constant 0 : index
    %c0_1 = arith.constant 0 : index
    %0 = vector.load %arg1[%c0, %c0_0, %c0_1] : memref<2x64x256xf32, #tpu.memory_space<vmem>>, vector<2x64x256xf32>
    %cst = arith.constant dense<0.000000e+00> : vector<2x64xf32>
    %1 = vector.multi_reduction <add>, %0, %cst [2] : vector<2x64x256xf32> to vector<2x64xf32>
    %cst_2 = arith.constant 3.906250e-03 : f32
    %2 = vector.broadcast %cst_2 : f32 to vector<2x64xf32>
    %3 = arith.mulf %1, %2 : vector<2x64xf32>
    %cst_3 = arith.constant dense<0xFF800000> : vector<2x64xf32>
    %4 = vector.multi_reduction <maximumf>, %0, %cst_3 [2] : vector<2x64x256xf32> to vector<2x64xf32>
    %5 = tpu.concatenate %3, %4 in 0 : vector<2x64xf32>, vector<2x64xf32> -> vector<4x64xf32>
    %c0_4 = arith.constant 0 : index
    %c0_5 = arith.constant 0 : index
    %6 = vector.load %arg2[%c0_4, %c0_5] : memref<64x4xf32, #tpu.memory_space<vmem>>, vector<64x4xf32>
    %c0_6 = arith.constant 0 : index
    %c0_7 = arith.constant 0 : index
    %7 = vector.load %arg3[%c0_6, %c0_7] : memref<4x64xf32, #tpu.memory_space<vmem>>, vector<4x64xf32>
    %cst_8 = arith.constant dense<0.000000e+00> : vector<4x4xf32>
    %8 = tpu.matmul %5, %6, %cst_8 {dimension_numbers = #tpu.dot_dimension_numbers<[1], [0], [0], [1], [0, 0, 1, 1], [], []>, precision = #tpu.contract_precision<fp32>} : vector<4x64xf32>, vector<64x4xf32>, vector<4x4xf32> -> vector<4x4xf32>
    %cst_9 = arith.constant 0.000000e+00 : f32
    %9 = vector.broadcast %cst_9 : f32 to vector<4x4xf32>
    %10 = arith.maximumf %8, %9 : vector<4x4xf32>
    %cst_10 = arith.constant dense<0.000000e+00> : vector<4x64xf32>
    %11 = tpu.matmul %10, %7, %cst_10 {dimension_numbers = #tpu.dot_dimension_numbers<[1], [0], [0], [1], [0, 0, 1, 1], [], []>, precision = #tpu.contract_precision<fp32>} : vector<4x4xf32>, vector<4x64xf32>, vector<4x64xf32> -> vector<4x64xf32>
    %12 = vector.extract_strided_slice %11 {offsets = [0, 0], sizes = [2, 64], strides = [1, 1]} : vector<4x64xf32> to vector<2x64xf32>
    %13 = vector.extract_strided_slice %11 {offsets = [2, 0], sizes = [2, 64], strides = [1, 1]} : vector<4x64xf32> to vector<2x64xf32>
    %14 = arith.addf %12, %13 : vector<2x64xf32>
    %15 = arith.negf %14 : vector<2x64xf32>
    %16 = math.exp %15 : vector<2x64xf32>
    %cst_11 = arith.constant 1.000000e+00 : f32
    %17 = vector.broadcast %cst_11 : f32 to vector<2x64xf32>
    %18 = arith.addf %17, %16 : vector<2x64xf32>
    %19 = arith.divf %17, %18 : vector<2x64xf32>
    %20 = vector.extract_strided_slice %19 {offsets = [0, 0], sizes = [1, 64], strides = [1, 1]} : vector<2x64xf32> to vector<1x64xf32>
    %c0_12 = arith.constant 0 : index
    %c0_13 = arith.constant 0 : index
    %c0_14 = arith.constant 0 : index
    %21 = vector.load %arg4[%c0_12, %c0_13, %c0_14] : memref<2x1x64xf32, #tpu.memory_space<vmem>>, vector<1x1x64xf32>
    %22 = vector.shape_cast %21 : vector<1x1x64xf32> to vector<1x64xf32>
    %23 = vector.shape_cast %20 : vector<1x64xf32> to vector<1x1x64xf32>
    tpu.vector_store %arg4[%c0_12, %c0_13, %c0_14], %23 {strides = array<i32>} : memref<2x1x64xf32, #tpu.memory_space<vmem>>, vector<1x1x64xf32>,
    %24 = vector.extract_strided_slice %19 {offsets = [1, 0], sizes = [1, 64], strides = [1, 1]} : vector<2x64xf32> to vector<1x64xf32>
    %c1 = arith.constant 1 : index
    %c0_15 = arith.constant 0 : index
    %c0_16 = arith.constant 0 : index
    %25 = vector.load %arg4[%c1, %c0_15, %c0_16] : memref<2x1x64xf32, #tpu.memory_space<vmem>>, vector<1x1x64xf32>
    %26 = vector.shape_cast %25 : vector<1x1x64xf32> to vector<1x64xf32>
    %27 = vector.shape_cast %24 : vector<1x64xf32> to vector<1x1x64xf32>
    tpu.vector_store %arg4[%c1, %c0_15, %c0_16], %27 {strides = array<i32>} : memref<2x1x64xf32, #tpu.memory_space<vmem>>, vector<1x1x64xf32>,
    return
  }
  func.func @transform_0(%arg0: i32) -> (i32, i32, i32) {
    %c0_i32 = arith.constant 0 : i32
    %c0_i32_0 = arith.constant 0 : i32
    %c0_i32_1 = arith.constant 0 : i32
    return %arg0, %c0_i32, %c0_i32_0 : i32, i32, i32
  }
  func.func @transform_1(%arg0: i32) -> (i32, i32) {
    %c0_i32 = arith.constant 0 : i32
    %c0_i32_0 = arith.constant 0 : i32
    %c0_i32_1 = arith.constant 0 : i32
    return %c0_i32, %c0_i32_0 : i32, i32
  }
  func.func @transform_2(%arg0: i32) -> (i32, i32) {
    %c0_i32 = arith.constant 0 : i32
    %c0_i32_0 = arith.constant 0 : i32
    %c0_i32_1 = arith.constant 0 : i32
    return %c0_i32, %c0_i32_0 : i32, i32
  }
  func.func @transform_3(%arg0: i32) -> (i32, i32, i32) {
    %c0_i32 = arith.constant 0 : i32
    %c0_i32_0 = arith.constant 0 : i32
    %c0_i32_1 = arith.constant 0 : i32
    return %arg0, %c0_i32, %c0_i32_0 : i32, i32, i32
  }
}

</mosaic_0001>

<llo_original>
// kernel: tpu_custom_call.1
$region0: #{tpu_custom_call.1}
  #allocation0 [shape = 'u32[]', space=smem, size = 0x4, offset = 0x4, fixed_abs, tag = 'smem constant byte address 0x4 - core index']
  #allocation1 [shape = 'u32[144,128]{1,0:T(1,128)}', space=vmem, size = 0x12000, scoped, tag = 'internal scratch']
  %s0 = inlined_call_operand.hbm [shape: f32[2,64,256], index: 0, kind: input, shape index: {}]
  %s1 = inlined_call_operand.vmem [shape: f32[64,4], index: 1, kind: input, shape index: {}]
  %s2 = inlined_call_operand.vmem [shape: f32[4,64], index: 2, kind: input, shape index: {}]
  %s3 = inlined_call_operand.hbm [shape: f32[2,1,64], index: 3, kind: output, shape index: {}]
  %s4 = sld [smem:[#allocation0]]
  $region26: #{tpu_custom_call.1} parent=0
    _
  %s6 = ssub.s32 1, %s4
  %s7 = scalar_select 0, %s6, %s4
  $region1: #{tpu_custom_call.1} parent=0
    #allocation2 [shape = 'u8[131072]{0}', space=vmem, size = 0x20000, scoped, tag = 'input window, operand 0, single buffered']
    #allocation3 [shape = 's32[1]{0}', space=sflag, size = 0x4, scoped, tag = 'scoped memory for tpu_custom_call.1']
    #allocation4 [shape = 's32[1]{0}', space=sflag, size = 0x4, scoped, tag = 'scoped memory for tpu_custom_call.1']
    #allocation5 [shape = 'u8[1024]{0}', space=vmem, size = 0x400, scoped, tag = 'output window, operand 0, single buffered']
    %8 = vsyncpa [#allocation3], 0
    %9 = vsyncpa [#allocation4], 0
    // Predicated region
    $region2: #{tpu_custom_call.1} parent=1 // pred_check
      _
    $region3: #{tpu_custom_call.1} parent=1 // pred_check_branch
      %11 = sbr.rel (0) target = $region5
    $region4: #{tpu_custom_call.1} parent=1 // pred_region
      %s13 = ssub.s32 4096, 4096
      %14 = vsyncadd [#allocation3], %s13
      %s15 = sshll.u32 [#allocation2], 4
      %s16 = int_to_ptr.vmem [resolvable:$true] %s15
      %21 = dma.hbm_to_vmem [thread:$0]  %s0, 4096, %s16, [#allocation3], 256, 256, 16
    $region5: #{tpu_custom_call.1} parent=1 // pred_fallthru
      _
    // Predicated region
    $region6: #{tpu_custom_call.1} parent=1 // pred_check
      _
    $region7: #{tpu_custom_call.1} parent=1 // pred_check_branch
      %23 = sbr.rel (0) target = $region9
    $region8: #{tpu_custom_call.1} parent=1 // pred_region
      _
    $region9: #{tpu_custom_call.1} parent=1 // pred_fallthru
      _
    // Predicated region
    $region10: #{tpu_custom_call.1} parent=1 // pred_check
      _
    $region11: #{tpu_custom_call.1} parent=1 // pred_check_branch
      %25 = sbr.rel (0) target = $region13
    $region12: #{tpu_custom_call.1} parent=1 // pred_region
      _
    $region13: #{tpu_custom_call.1} parent=1 // pred_fallthru
      _
    // Predicated region
    $region14: #{tpu_custom_call.1} parent=1 // pred_check
      _
    $region15: #{tpu_custom_call.1} parent=1 // pred_check_branch
      %27 = sbr.rel (0) target = $region17
    $region16: #{tpu_custom_call.1} parent=1 // pred_region
      %28 = dma.done [#allocation3], 4096
    $region17: #{tpu_custom_call.1} parent=1 // pred_fallthru
      _
    %v29 = vld [vmem:[#allocation2] sm:$0xff]
    %v30 = vld [vmem:[#allocation2 + $0x8] sm:$0xff]
    %v31 = vld [vmem:[#allocation2 + $0x10] sm:$0xff]
    %v32 = vld [vmem:[#allocation2 + $0x18] sm:$0xff]
    %v33 = vld [vmem:[#allocation2 + $0x20] sm:$0xff]
    %v34 = vld [vmem:[#allocation2 + $0x28] sm:$0xff]
    %v35 = vld [vmem:[#allocation2 + $0x30] sm:$0xff]
    %v36 = vld [vmem:[#allocation2 + $0x38] sm:$0xff]
    %v37 = vld [vmem:[#allocation2 + $0x40] sm:$0xff]
    %v38 = vld [vmem:[#allocation2 + $0x48] sm:$0xff]
    %v39 = vld [vmem:[#allocation2 + $0x50] sm:$0xff]
    %v40 = vld [vmem:[#allocation2 + $0x58] sm:$0xff]
    %v41 = vld [vmem:[#allocation2 + $0x60] sm:$0xff]
    %v42 = vld [vmem:[#allocation2 + $0x68] sm:$0xff]
    %v43 = vld [vmem:[#allocation2 + $0x70] sm:$0xff]
    %v44 = vld [vmem:[#allocation2 + $0x78] sm:$0xff]
    %v45 = vld [vmem:[#allocation2 + $0x80] sm:$0xff]
    %v46 = vld [vmem:[#allocation2 + $0x88] sm:$0xff]
    %v47 = vld [vmem:[#allocation2 + $0x90] sm:$0xff]
    %v48 = vld [vmem:[#allocation2 + $0x98] sm:$0xff]
    %v49 = vld [vmem:[#allocation2 + $0xa0] sm:$0xff]
    %v50 = vld [vmem:[#allocation2 + $0xa8] sm:$0xff]
    %v51 = vld [vmem:[#allocation2 + $0xb0] sm:$0xff]
    %v52 = vld [vmem:[#allocation2 + $0xb8] sm:$0xff]
    %v53 = vld [vmem:[#allocation2 + $0xc0] sm:$0xff]
    %v54 = vld [vmem:[#allocation2 + $0xc8] sm:$0xff]
    %v55 = vld [vmem:[#allocation2 + $0xd0] sm:$0xff]
    %v56 = vld [vmem:[#allocation2 + $0xd8] sm:$0xff]
    %v57 = vld [vmem:[#allocation2 + $0xe0] sm:$0xff]
    %v58 = vld [vmem:[#allocation2 + $0xe8] sm:$0xff]
    %v59 = vld [vmem:[#allocation2 + $0xf0] sm:$0xff]
    %v60 = vld [vmem:[#allocation2 + $0xf8] sm:$0xff]
    %v61 = vadd.f32 %v29, %v30
    %62 = vadd.xlane.f32.xlu0 %v61
    %v63 = vpop.xlane.xlu0 %62
    %v64 = vadd.f32 %v31, %v32
    %65 = vadd.xlane.f32.xlu0 %v64
    %v66 = vpop.xlane.xlu0 %65
    %v67 = vadd.f32 %v33, %v34
    %68 = vadd.xlane.f32.xlu0 %v67
    %v69 = vpop.xlane.xlu0 %68
    %v70 = vadd.f32 %v35, %v36
    %71 = vadd.xlane.f32.xlu0 %v70
    %v72 = vpop.xlane.xlu0 %71
    %v73 = vadd.f32 %v37, %v38
    %74 = vadd.xlane.f32.xlu0 %v73
    %v75 = vpop.xlane.xlu0 %74
    %v76 = vadd.f32 %v39, %v40
    %77 = vadd.xlane.f32.xlu0 %v76
    %v78 = vpop.xlane.xlu0 %77
    %v79 = vadd.f32 %v41, %v42
    %80 = vadd.xlane.f32.xlu0 %v79
    %v81 = vpop.xlane.xlu0 %80
    %v82 = vadd.f32 %v43, %v44
    %83 = vadd.xlane.f32.xlu0 %v82
    %v84 = vpop.xlane.xlu0 %83
    %v85 = vadd.f32 %v45, %v46
    %86 = vadd.xlane.f32.xlu0 %v85
    %v87 = vpop.xlane.xlu0 %86
    %v88 = vadd.f32 %v47, %v48
    %89 = vadd.xlane.f32.xlu0 %v88
    %v90 = vpop.xlane.xlu0 %89
    %v91 = vadd.f32 %v49, %v50
    %92 = vadd.xlane.f32.xlu0 %v91
    %v93 = vpop.xlane.xlu0 %92
    %v94 = vadd.f32 %v51, %v52
    %95 = vadd.xlane.f32.xlu0 %v94
    %v96 = vpop.xlane.xlu0 %95
    %v97 = vadd.f32 %v53, %v54
    %98 = vadd.xlane.f32.xlu0 %v97
    %v99 = vpop.xlane.xlu0 %98
    %v100 = vadd.f32 %v55, %v56
    %101 = vadd.xlane.f32.xlu0 %v100
    %v102 = vpop.xlane.xlu0 %101
    %v103 = vadd.f32 %v57, %v58
    %104 = vadd.xlane.f32.xlu0 %v103
    %v105 = vpop.xlane.xlu0 %104
    %v106 = vadd.f32 %v59, %v60
    %107 = vadd.xlane.f32.xlu0 %v106
    %v108 = vpop.xlane.xlu0 %107
    %v109 = vmul.f32 %v63, 0.00390625
    %v110 = vmul.f32 %v66, 0.00390625
    %v111 = vmul.f32 %v69, 0.00390625
    %v112 = vmul.f32 %v72, 0.00390625
    %v113 = vmul.f32 %v75, 0.00390625
    %v114 = vmul.f32 %v78, 0.00390625
    %v115 = vmul.f32 %v81, 0.00390625
    %v116 = vmul.f32 %v84, 0.00390625
    %v117 = vmul.f32 %v87, 0.00390625
    %v118 = vmul.f32 %v90, 0.00390625
    %v119 = vmul.f32 %v93, 0.00390625
    %v120 = vmul.f32 %v96, 0.00390625
    %v121 = vmul.f32 %v99, 0.00390625
    %v122 = vmul.f32 %v102, 0.00390625
    %v123 = vmul.f32 %v105, 0.00390625
    %v124 = vmul.f32 %v108, 0.00390625
    %v125 = vmax.f32 %v29, %v30
    %126 = vmax.xlane.f32.xlu0 %v125
    %v127 = vpop.xlane.xlu0 %126
    %v128 = vmax.f32 %v31, %v32
    %129 = vmax.xlane.f32.xlu0 %v128
    %v130 = vpop.xlane.xlu0 %129
    %v131 = vmax.f32 %v33, %v34
    %132 = vmax.xlane.f32.xlu0 %v131
    %v133 = vpop.xlane.xlu0 %132
    %v134 = vmax.f32 %v35, %v36
    %135 = vmax.xlane.f32.xlu0 %v134
    %v136 = vpop.xlane.xlu0 %135
    %v137 = vmax.f32 %v37, %v38
    %138 = vmax.xlane.f32.xlu0 %v137
    %v139 = vpop.xlane.xlu0 %138
    %v140 = vmax.f32 %v39, %v40
    %141 = vmax.xlane.f32.xlu0 %v140
    %v142 = vpop.xlane.xlu0 %141
    %v143 = vmax.f32 %v41, %v42
    %144 = vmax.xlane.f32.xlu0 %v143
    %v145 = vpop.xlane.xlu0 %144
    %v146 = vmax.f32 %v43, %v44
    %147 = vmax.xlane.f32.xlu0 %v146
    %v148 = vpop.xlane.xlu0 %147
    %v149 = vmax.f32 %v45, %v46
    %150 = vmax.xlane.f32.xlu0 %v149
    %v151 = vpop.xlane.xlu0 %150
    %v152 = vmax.f32 %v47, %v48
    %153 = vmax.xlane.f32.xlu0 %v152
    %v154 = vpop.xlane.xlu0 %153
    %v155 = vmax.f32 %v49, %v50
    %156 = vmax.xlane.f32.xlu0 %v155
    %v157 = vpop.xlane.xlu0 %156
    %v158 = vmax.f32 %v51, %v52
    %159 = vmax.xlane.f32.xlu0 %v158
    %v160 = vpop.xlane.xlu0 %159
    %v161 = vmax.f32 %v53, %v54
    %162 = vmax.xlane.f32.xlu0 %v161
    %v163 = vpop.xlane.xlu0 %162
    %v164 = vmax.f32 %v55, %v56
    %165 = vmax.xlane.f32.xlu0 %v164
    %v166 = vpop.xlane.xlu0 %165
    %v167 = vmax.f32 %v57, %v58
    %168 = vmax.xlane.f32.xlu0 %v167
    %v169 = vpop.xlane.xlu0 %168
    %v170 = vmax.f32 %v59, %v60
    %171 = vmax.xlane.f32.xlu0 %v170
    %v172 = vpop.xlane.xlu0 %171
    %v189 = vlaneseq
    %v190 = vand.u32 %v189, 127
    %v191 = vlaneseq
    %v192 = vshrl.u32 %v191, 7
    %v193 = vsub.s32 %v190, %v192
    %v194 = vrot.slane %v109, %v193
    %v195 = vadd.s32 %v190, 4294967288
    %v196 = vlaneseq
    %v197 = vshrl.u32 %v196, 7
    %v198 = vsub.s32 %v195, %v197
    %v199 = vrot.slane %v110, %v198
    %vm200 = vcmask 130112
    %v201 = vsel %vm200, %v199, %v194
    %v202 = vadd.s32 %v190, 4294967280
    %v203 = vlaneseq
    %v204 = vshrl.u32 %v203, 7
    %v205 = vsub.s32 %v202, %v204
    %v206 = vrot.slane %v111, %v205
    %vm207 = vcmask 195712
    %v208 = vsel %vm207, %v206, %v201
    %v209 = vadd.s32 %v190, 4294967272
    %v210 = vlaneseq
    %v211 = vshrl.u32 %v210, 7
    %v212 = vsub.s32 %v209, %v211
    %v213 = vrot.slane %v112, %v212
    %vm214 = vcmask 261312
    %v215 = vsel %vm214, %v213, %v208
    %v216 = vadd.s32 %v190, 4294967264
    %v217 = vlaneseq
    %v218 = vshrl.u32 %v217, 7
    %v219 = vsub.s32 %v216, %v218
    %v220 = vrot.slane %v113, %v219
    %vm221 = vcmask 326912
    %v222 = vsel %vm221, %v220, %v215
    %v223 = vadd.s32 %v190, 4294967256
    %v224 = vlaneseq
    %v225 = vshrl.u32 %v224, 7
    %v226 = vsub.s32 %v223, %v225
    %v227 = vrot.slane %v114, %v226
    %vm228 = vcmask 392512
    %v229 = vsel %vm228, %v227, %v222
    %v230 = vadd.s32 %v190, 4294967248
    %v231 = vlaneseq
    %v232 = vshrl.u32 %v231, 7
    %v233 = vsub.s32 %v230, %v232
    %v234 = vrot.slane %v115, %v233
    %vm235 = vcmask 458112
    %v236 = vsel %vm235, %v234, %v229
    %v237 = vadd.s32 %v190, 4294967240
    %v238 = vlaneseq
    %v239 = vshrl.u32 %v238, 7
    %v240 = vsub.s32 %v237, %v239
    %v241 = vrot.slane %v116, %v240
    %vm242 = vcmask 523712
    %v243 = vsel %vm242, %v241, %v236
    %v244 = vlaneseq
    %v245 = vshrl.u32 %v244, 7
    %v246 = vsub.s32 %v190, %v245
    %v247 = vrot.slane %v117, %v246
    %v248 = vlaneseq
    %v249 = vshrl.u32 %v248, 7
    %v250 = vsub.s32 %v195, %v249
    %v251 = vrot.slane %v118, %v250
    %v252 = vsel %vm200, %v251, %v247
    %v253 = vlaneseq
    %v254 = vshrl.u32 %v253, 7
    %v255 = vsub.s32 %v202, %v254
    %v256 = vrot.slane %v119, %v255
    %v257 = vsel %vm207, %v256, %v252
    %v258 = vlaneseq
    %v259 = vshrl.u32 %v258, 7
    %v260 = vsub.s32 %v209, %v259
    %v261 = vrot.slane %v120, %v260
    %v262 = vsel %vm214, %v261, %v257
    %v263 = vlaneseq
    %v264 = vshrl.u32 %v263, 7
    %v265 = vsub.s32 %v216, %v264
    %v266 = vrot.slane %v121, %v265
    %v267 = vsel %vm221, %v266, %v262
    %v268 = vlaneseq
    %v269 = vshrl.u32 %v268, 7
    %v270 = vsub.s32 %v223, %v269
    %v271 = vrot.slane %v122, %v270
    %v272 = vsel %vm228, %v271, %v267
    %v273 = vlaneseq
    %v274 = vshrl.u32 %v273, 7
    %v275 = vsub.s32 %v230, %v274
    %v276 = vrot.slane %v123, %v275
    %v277 = vsel %vm235, %v276, %v272
    %v278 = vlaneseq
    %v279 = vshrl.u32 %v278, 7
    %v280 = vsub.s32 %v237, %v279
    %v281 = vrot.slane %v124, %v280
    %v282 = vsel %vm242, %v281, %v277
    %vm283 = vcmask 1041409
    %v284 = vsel %vm283, %v282, %v243
    %v302 = vlaneseq
    %v303 = vshrl.u32 %v302, 7
    %v304 = vsub.s32 %v190, %v303
    %v305 = vrot.slane %v127, %v304
    %v306 = vlaneseq
    %v307 = vshrl.u32 %v306, 7
    %v308 = vsub.s32 %v195, %v307
    %v309 = vrot.slane %v130, %v308
    %v310 = vsel %vm200, %v309, %v305
    %v311 = vlaneseq
    %v312 = vshrl.u32 %v311, 7
    %v313 = vsub.s32 %v202, %v312
    %v314 = vrot.slane %v133, %v313
    %v315 = vsel %vm207, %v314, %v310
    %v316 = vlaneseq
    %v317 = vshrl.u32 %v316, 7
    %v318 = vsub.s32 %v209, %v317
    %v319 = vrot.slane %v136, %v318
    %v320 = vsel %vm214, %v319, %v315
    %v321 = vlaneseq
    %v322 = vshrl.u32 %v321, 7
    %v323 = vsub.s32 %v216, %v322
    %v324 = vrot.slane %v139, %v323
    %v325 = vsel %vm221, %v324, %v320
    %v326 = vlaneseq
    %v327 = vshrl.u32 %v326, 7
    %v328 = vsub.s32 %v223, %v327
    %v329 = vrot.slane %v142, %v328
    %v330 = vsel %vm228, %v329, %v325
    %v331 = vlaneseq
    %v332 = vshrl.u32 %v331, 7
    %v333 = vsub.s32 %v230, %v332
    %v334 = vrot.slane %v145, %v333
    %v335 = vsel %vm235, %v334, %v330
    %v336 = vlaneseq
    %v337 = vshrl.u32 %v336, 7
    %v338 = vsub.s32 %v237, %v337
    %v339 = vrot.slane %v148, %v338
    %v340 = vsel %vm242, %v339, %v335
    %v341 = vlaneseq
    %v342 = vshrl.u32 %v341, 7
    %v343 = vsub.s32 %v190, %v342
    %v344 = vrot.slane %v151, %v343
    %v345 = vlaneseq
    %v346 = vshrl.u32 %v345, 7
    %v347 = vsub.s32 %v195, %v346
    %v348 = vrot.slane %v154, %v347
    %v349 = vsel %vm200, %v348, %v344
    %v350 = vlaneseq
    %v351 = vshrl.u32 %v350, 7
    %v352 = vsub.s32 %v202, %v351
    %v353 = vrot.slane %v157, %v352
    %v354 = vsel %vm207, %v353, %v349
    %v355 = vlaneseq
    %v356 = vshrl.u32 %v355, 7
    %v357 = vsub.s32 %v209, %v356
    %v358 = vrot.slane %v160, %v357
    %v359 = vsel %vm214, %v358, %v354
    %v360 = vlaneseq
    %v361 = vshrl.u32 %v360, 7
    %v362 = vsub.s32 %v216, %v361
    %v363 = vrot.slane %v163, %v362
    %v364 = vsel %vm221, %v363, %v359
    %v365 = vlaneseq
    %v366 = vshrl.u32 %v365, 7
    %v367 = vsub.s32 %v223, %v366
    %v368 = vrot.slane %v166, %v367
    %v369 = vsel %vm228, %v368, %v364
    %v370 = vlaneseq
    %v371 = vshrl.u32 %v370, 7
    %v372 = vsub.s32 %v230, %v371
    %v373 = vrot.slane %v169, %v372
    %v374 = vsel %vm235, %v373, %v369
    %v375 = vlaneseq
    %v376 = vshrl.u32 %v375, 7
    %v377 = vsub.s32 %v237, %v376
    %v378 = vrot.slane %v172, %v377
    %v379 = vsel %vm242, %v378, %v374
    %vm380 = vcmask 1043459
    %v381 = vsel %vm380, %v379, %v340
    %vm383 = vcmask 1041408
    %v384 = vsel %vm383, %v284, %v381
    %v385 = vld [vmem:[%s1] sm:$0xff]
    %v386 = vld [vmem:[%s1 + $0x8] sm:$0xff]
    %v387 = vld [vmem:[%s1 + $0x10] sm:$0xff]
    %v388 = vld [vmem:[%s1 + $0x18] sm:$0xff]
    %v389 = vld [vmem:[%s1 + $0x20] sm:$0xff]
    %v390 = vld [vmem:[%s1 + $0x28] sm:$0xff]
    %v391 = vld [vmem:[%s1 + $0x30] sm:$0xff]
    %v392 = vld [vmem:[%s1 + $0x38] sm:$0xff]
    %v393 = vld [vmem:[%s2] sm:$0xf]
    %vm394 = vcmask 523264
    %v396 = vsel %vm394, %v384, 0
    %398 = vmatprep.subr.mxu0 0.0
    %v399 = vand.u32 %v385, 4294901760
    %400 = vmatpush1.msra.mxu0 %v399
    %401 = vmatprep.subr.mxu0 0.0
    %v402 = vand.u32 %v386, 4294901760
    %403 = vmatpush1.msra.mxu0 %v402
    %404 = vmatprep.subr.mxu0 0.0
    %v405 = vand.u32 %v387, 4294901760
    %406 = vmatpush1.msra.mxu0 %v405
    %407 = vmatprep.subr.mxu0 0.0
    %v408 = vand.u32 %v388, 4294901760
    %409 = vmatpush1.msra.mxu0 %v408
    %410 = vmatprep.subr.mxu0 0.0
    %v411 = vand.u32 %v389, 4294901760
    %412 = vmatpush1.msra.mxu0 %v411
    %413 = vmatprep.subr.mxu0 0.0
    %v414 = vand.u32 %v390, 4294901760
    %415 = vmatpush1.msra.mxu0 %v414
    %416 = vmatprep.subr.mxu0 0.0
    %v417 = vand.u32 %v391, 4294901760
    %418 = vmatpush1.msra.mxu0 %v417
    %419 = vmatprep.subr.mxu0 0.0
    %v420 = vand.u32 %v392, 4294901760
    %421 = vmatpush1.msra.mxu0 %v420
    %422 = vmatprep.subr.mxu0 0.0
    %423 = vmatpush1.msra.mxu0 0.0
    %424 = vmatprep.subr.mxu0 0.0
    %425 = vmatpush1.msra.mxu0 0.0
    %426 = vmatprep.subr.mxu0 0.0
    %427 = vmatpush1.msra.mxu0 0.0
    %428 = vmatprep.subr.mxu0 0.0
    %429 = vmatpush1.msra.mxu0 0.0
    %430 = vmatprep.subr.mxu0 0.0
    %431 = vmatpush1.msra.mxu0 0.0
    %432 = vmatprep.subr.mxu0 0.0
    %433 = vmatpush1.msra.mxu0 0.0
    %434 = vmatprep.subr.mxu0 0.0
    %435 = vmatpush1.msra.mxu0 0.0
    %436 = vmatprep.subr.mxu0 0.0
    %437 = vmatpush1.msra.mxu0 0.0
    %438 = vmatprep.subr.mxu0 0.0
    %439 = vmatpush1.msra.mxu0 0.0
    %440 = vmatprep.subr.mxu0 0.0
    %441 = vmatpush1.msra.mxu0 0.0
    %442 = vmatprep.subr.mxu0 0.0
    %443 = vmatpush1.msra.mxu0 0.0
    %444 = vmatprep.subr.mxu0 0.0
    %445 = vmatpush1.msra.mxu0 0.0
    %446 = vmatprep.subr.mxu0 0.0
    %447 = vmatpush1.msra.mxu0 0.0
    %448 = vmatprep.subr.mxu0 0.0
    %449 = vmatpush1.msra.mxu0 0.0
    %450 = vmatprep.subr.mxu0 0.0
    %451 = vmatpush1.msra.mxu0 0.0
    %452 = vmatprep.subr.mxu0 0.0
    %453 = vmatpush1.msra.mxu0 0.0
    %454 = vmatprep.subr.mxu0 0.0
    %455 = vmatpush1.msra.mxu0 0.0
    %456 = vmatprep.subr.mxu0 0.0
    %457 = vmatpush1.msra.mxu0 0.0
    %458 = vmatprep.subr.mxu0 0.0
    %459 = vmatpush1.msra.mxu0 0.0
    %460 = vmatprep.subr.mxu0 0.0
    %461 = vmatpush1.msra.mxu0 0.0
    %462 = vmatprep.subr.mxu0 0.0
    %463 = vmatpush1.msra.mxu0 0.0
    %464 = vmatprep.subr.mxu0 0.0
    %465 = vmatpush1.msra.mxu0 0.0
    %466 = vmatprep.subr.mxu0 0.0
    %467 = vmatpush1.msra.mxu0 0.0
    %468 = vmatprep.subr.mxu0 0.0
    %469 = vmatpush1.msra.mxu0 0.0
    %470 = vmatprep.mubr.f32.mxu0 0.0
    %v471 = vand.u32 %v396, 4294901760
    %v472 = vsub.f32 %v396, %v471
    %v473 = vand.u32 %v472, 4294901760
    %v474 = vsub.f32 %v472, %v473
    %v475 = vand.u32 %v474, 4294901760
    %476 = vmatmul.mubr.f32.gmra.mrb[0].mxu0 %v475
    %v477 = vpop.f32.mrb[0].mxu0
    %v478 = vadd.f32 0.0, %v477
    %v479 = vpop.f32.mrb[0].mxu0
    %480 = vdwg.mxu0
    %481 = vmatprep.subr.mxu0 0.0
    %v482 = vand.u32 %v385, 4294901760
    %v483 = vsub.f32 %v385, %v482
    %v484 = vand.u32 %v483, 4294901760
    %v485 = vsub.f32 %v483, %v484
    %v486 = vand.u32 %v485, 4294901760
    %487 = vmatpush1.msra.mxu0 %v486
    %488 = vmatprep.subr.mxu0 0.0
    %v489 = vand.u32 %v386, 4294901760
    %v490 = vsub.f32 %v386, %v489
    %v491 = vand.u32 %v490, 4294901760
    %v492 = vsub.f32 %v490, %v491
    %v493 = vand.u32 %v492, 4294901760
    %494 = vmatpush1.msra.mxu0 %v493
    %495 = vmatprep.subr.mxu0 0.0
    %v496 = vand.u32 %v387, 4294901760
    %v497 = vsub.f32 %v387, %v496
    %v498 = vand.u32 %v497, 4294901760
    %v499 = vsub.f32 %v497, %v498
    %v500 = vand.u32 %v499, 4294901760
    %501 = vmatpush1.msra.mxu0 %v500
    %502 = vmatprep.subr.mxu0 0.0
    %v503 = vand.u32 %v388, 4294901760
    %v504 = vsub.f32 %v388, %v503
    %v505 = vand.u32 %v504, 4294901760
    %v506 = vsub.f32 %v504, %v505
    %v507 = vand.u32 %v506, 4294901760
    %508 = vmatpush1.msra.mxu0 %v507
    %509 = vmatprep.subr.mxu0 0.0
    %v510 = vand.u32 %v389, 4294901760
    %v511 = vsub.f32 %v389, %v510
    %v512 = vand.u32 %v511, 4294901760
    %v513 = vsub.f32 %v511, %v512
    %v514 = vand.u32 %v513, 4294901760
    %515 = vmatpush1.msra.mxu0 %v514
    %516 = vmatprep.subr.mxu0 0.0
    %v517 = vand.u32 %v390, 4294901760
    %v518 = vsub.f32 %v390, %v517
    %v519 = vand.u32 %v518, 4294901760
    %v520 = vsub.f32 %v518, %v519
    %v521 = vand.u32 %v520, 4294901760
    %522 = vmatpush1.msra.mxu0 %v521
    %523 = vmatprep.subr.mxu0 0.0
    %v524 = vand.u32 %v391, 4294901760
    %v525 = vsub.f32 %v391, %v524
    %v526 = vand.u32 %v525, 4294901760
    %v527 = vsub.f32 %v525, %v526
    %v528 = vand.u32 %v527, 4294901760
    %529 = vmatpush1.msra.mxu0 %v528
    %530 = vmatprep.subr.mxu0 0.0
    %v531 = vand.u32 %v392, 4294901760
    %v532 = vsub.f32 %v392, %v531
    %v533 = vand.u32 %v532, 4294901760
    %v534 = vsub.f32 %v532, %v533
    %v535 = vand.u32 %v534, 4294901760
    %536 = vmatpush1.msra.mxu0 %v535
    %537 = vmatprep.subr.mxu0 0.0
    %538 = vmatpush1.msra.mxu0 0.0
    %539 = vmatprep.subr.mxu0 0.0
    %540 = vmatpush1.msra.mxu0 0.0
    %541 = vmatprep.subr.mxu0 0.0
    %542 = vmatpush1.msra.mxu0 0.0
    %543 = vmatprep.subr.mxu0 0.0
    %544 = vmatpush1.msra.mxu0 0.0
    %545 = vmatprep.subr.mxu0 0.0
    %546 = vmatpush1.msra.mxu0 0.0
    %547 = vmatprep.subr.mxu0 0.0
    %548 = vmatpush1.msra.mxu0 0.0
    %549 = vmatprep.subr.mxu0 0.0
    %550 = vmatpush1.msra.mxu0 0.0
    %551 = vmatprep.subr.mxu0 0.0
    %552 = vmatpush1.msra.mxu0 0.0
    %553 = vmatprep.subr.mxu0 0.0
    %554 = vmatpush1.msra.mxu0 0.0
    %555 = vmatprep.subr.mxu0 0.0
    %556 = vmatpush1.msra.mxu0 0.0
    %557 = vmatprep.subr.mxu0 0.0
    %558 = vmatpush1.msra.mxu0 0.0
    %559 = vmatprep.subr.mxu0 0.0
    %560 = vmatpush1.msra.mxu0 0.0
    %561 = vmatprep.subr.mxu0 0.0
    %562 = vmatpush1.msra.mxu0 0.0
    %563 = vmatprep.subr.mxu0 0.0
    %564 = vmatpush1.msra.mxu0 0.0
    %565 = vmatprep.subr.mxu0 0.0
    %566 = vmatpush1.msra.mxu0 0.0
    %567 = vmatprep.subr.mxu0 0.0
    %568 = vmatpush1.msra.mxu0 0.0
    %569 = vmatprep.subr.mxu0 0.0
    %570 = vmatpush1.msra.mxu0 0.0
    %571 = vmatprep.subr.mxu0 0.0
    %572 = vmatpush1.msra.mxu0 0.0
    %573 = vmatprep.subr.mxu0 0.0
    %574 = vmatpush1.msra.mxu0 0.0
    %575 = vmatprep.subr.mxu0 0.0
    %576 = vmatpush1.msra.mxu0 0.0
    %577 = vmatprep.subr.mxu0 0.0
    %578 = vmatpush1.msra.mxu0 0.0
    %579 = vmatprep.subr.mxu0 0.0
    %580 = vmatpush1.msra.mxu0 0.0
    %581 = vmatprep.subr.mxu0 0.0
    %582 = vmatpush1.msra.mxu0 0.0
    %583 = vmatprep.subr.mxu0 0.0
    %584 = vmatpush1.msra.mxu0 0.0
    %585 = vmatprep.mubr.f32.mxu0 0.0
    %v586 = vand.u32 %v396, 4294901760
    %587 = vmatmul.mubr.f32.gmra.mrb[0].mxu0 %v586
    %v588 = vpop.f32.mrb[0].mxu0
    %v589 = vadd.f32 %v478, %v588
    %v590 = vpop.f32.mrb[0].mxu0
    %591 = vdwg.mxu0
    %592 = vmatprep.subr.mxu0 0.0
    %v593 = vand.u32 %v385, 4294901760
    %v594 = vsub.f32 %v385, %v593
    %595 = vmatpush1.msra.mxu0 %v594
    %596 = vmatprep.subr.mxu0 0.0
    %v597 = vand.u32 %v386, 4294901760
    %v598 = vsub.f32 %v386, %v597
    %599 = vmatpush1.msra.mxu0 %v598
    %600 = vmatprep.subr.mxu0 0.0
    %v601 = vand.u32 %v387, 4294901760
    %v602 = vsub.f32 %v387, %v601
    %603 = vmatpush1.msra.mxu0 %v602
    %604 = vmatprep.subr.mxu0 0.0
    %v605 = vand.u32 %v388, 4294901760
    %v606 = vsub.f32 %v388, %v605
    %607 = vmatpush1.msra.mxu0 %v606
    %608 = vmatprep.subr.mxu0 0.0
    %v609 = vand.u32 %v389, 4294901760
    %v610 = vsub.f32 %v389, %v609
    %611 = vmatpush1.msra.mxu0 %v610
    %612 = vmatprep.subr.mxu0 0.0
    %v613 = vand.u32 %v390, 4294901760
    %v614 = vsub.f32 %v390, %v613
    %615 = vmatpush1.msra.mxu0 %v614
    %616 = vmatprep.subr.mxu0 0.0
    %v617 = vand.u32 %v391, 4294901760
    %v618 = vsub.f32 %v391, %v617
    %619 = vmatpush1.msra.mxu0 %v618
    %620 = vmatprep.subr.mxu0 0.0
    %v621 = vand.u32 %v392, 4294901760
    %v622 = vsub.f32 %v392, %v621
    %623 = vmatpush1.msra.mxu0 %v622
    %624 = vmatprep.subr.mxu0 0.0
    %625 = vmatpush1.msra.mxu0 0.0
    %626 = vmatprep.subr.mxu0 0.0
    %627 = vmatpush1.msra.mxu0 0.0
    %628 = vmatprep.subr.mxu0 0.0
    %629 = vmatpush1.msra.mxu0 0.0
    %630 = vmatprep.subr.mxu0 0.0
    %631 = vmatpush1.msra.mxu0 0.0
    %632 = vmatprep.subr.mxu0 0.0
    %633 = vmatpush1.msra.mxu0 0.0
    %634 = vmatprep.subr.mxu0 0.0
    %635 = vmatpush1.msra.mxu0 0.0
    %636 = vmatprep.subr.mxu0 0.0
    %637 = vmatpush1.msra.mxu0 0.0
    %638 = vmatprep.subr.mxu0 0.0
    %639 = vmatpush1.msra.mxu0 0.0
    %640 = vmatprep.subr.mxu0 0.0
    %641 = vmatpush1.msra.mxu0 0.0
    %642 = vmatprep.subr.mxu0 0.0
    %643 = vmatpush1.msra.mxu0 0.0
    %644 = vmatprep.subr.mxu0 0.0
    %645 = vmatpush1.msra.mxu0 0.0
    %646 = vmatprep.subr.mxu0 0.0
    %647 = vmatpush1.msra.mxu0 0.0
    %648 = vmatprep.subr.mxu0 0.0
    %649 = vmatpush1.msra.mxu0 0.0
    %650 = vmatprep.subr.mxu0 0.0
    %651 = vmatpush1.msra.mxu0 0.0
    %652 = vmatprep.subr.mxu0 0.0
    %653 = vmatpush1.msra.mxu0 0.0
    %654 = vmatprep.subr.mxu0 0.0
    %655 = vmatpush1.msra.mxu0 0.0
    %656 = vmatprep.subr.mxu0 0.0
    %657 = vmatpush1.msra.mxu0 0.0
    %658 = vmatprep.subr.mxu0 0.0
    %659 = vmatpush1.msra.mxu0 0.0
    %660 = vmatprep.subr.mxu0 0.0
    %661 = vmatpush1.msra.mxu0 0.0
    %662 = vmatprep.subr.mxu0 0.0
    %663 = vmatpush1.msra.mxu0 0.0
    %664 = vmatprep.subr.mxu0 0.0
    %665 = vmatpush1.msra.mxu0 0.0
    %666 = vmatprep.subr.mxu0 0.0
    %667 = vmatpush1.msra.mxu0 0.0
    %668 = vmatprep.subr.mxu0 0.0
    %669 = vmatpush1.msra.mxu0 0.0
    %670 = vmatprep.subr.mxu0 0.0
    %671 = vmatpush1.msra.mxu0 0.0
    %672 = vmatprep.mubr.f32.mxu0 0.0
    %v673 = vand.u32 %v396, 4294901760
    %v674 = vsub.f32 %v396, %v673
    %675 = vmatmul.mubr.f32.gmra.mrb[0].mxu0 %v674
    %v676 = vpop.f32.mrb[0].mxu0
    %v677 = vadd.f32 %v589, %v676
    %v678 = vpop.f32.mrb[0].mxu0
    %679 = vdwg.mxu0
    %680 = vmatprep.subr.mxu0 0.0
    %v681 = vand.u32 %v385, 4294901760
    %682 = vmatpush1.msra.mxu0 %v681
    %683 = vmatprep.subr.mxu0 0.0
    %v684 = vand.u32 %v386, 4294901760
    %685 = vmatpush1.msra.mxu0 %v684
    %686 = vmatprep.subr.mxu0 0.0
    %v687 = vand.u32 %v387, 4294901760
    %688 = vmatpush1.msra.mxu0 %v687
    %689 = vmatprep.subr.mxu0 0.0
    %v690 = vand.u32 %v388, 4294901760
    %691 = vmatpush1.msra.mxu0 %v690
    %692 = vmatprep.subr.mxu0 0.0
    %v693 = vand.u32 %v389, 4294901760
    %694 = vmatpush1.msra.mxu0 %v693
    %695 = vmatprep.subr.mxu0 0.0
    %v696 = vand.u32 %v390, 4294901760
    %697 = vmatpush1.msra.mxu0 %v696
    %698 = vmatprep.subr.mxu0 0.0
    %v699 = vand.u32 %v391, 4294901760
    %700 = vmatpush1.msra.mxu0 %v699
    %701 = vmatprep.subr.mxu0 0.0
    %v702 = vand.u32 %v392, 4294901760
    %703 = vmatpush1.msra.mxu0 %v702
    %704 = vmatprep.subr.mxu0 0.0
    %705 = vmatpush1.msra.mxu0 0.0
    %706 = vmatprep.subr.mxu0 0.0
    %707 = vmatpush1.msra.mxu0 0.0
    %708 = vmatprep.subr.mxu0 0.0
    %709 = vmatpush1.msra.mxu0 0.0
    %710 = vmatprep.subr.mxu0 0.0
    %711 = vmatpush1.msra.mxu0 0.0
    %712 = vmatprep.subr.mxu0 0.0
    %713 = vmatpush1.msra.mxu0 0.0
    %714 = vmatprep.subr.mxu0 0.0
    %715 = vmatpush1.msra.mxu0 0.0
    %716 = vmatprep.subr.mxu0 0.0
    %717 = vmatpush1.msra.mxu0 0.0
    %718 = vmatprep.subr.mxu0 0.0
    %719 = vmatpush1.msra.mxu0 0.0
    %720 = vmatprep.subr.mxu0 0.0
    %721 = vmatpush1.msra.mxu0 0.0
    %722 = vmatprep.subr.mxu0 0.0
    %723 = vmatpush1.msra.mxu0 0.0
    %724 = vmatprep.subr.mxu0 0.0
    %725 = vmatpush1.msra.mxu0 0.0
    %726 = vmatprep.subr.mxu0 0.0
    %727 = vmatpush1.msra.mxu0 0.0
    %728 = vmatprep.subr.mxu0 0.0
    %729 = vmatpush1.msra.mxu0 0.0
    %730 = vmatprep.subr.mxu0 0.0
    %731 = vmatpush1.msra.mxu0 0.0
    %732 = vmatprep.subr.mxu0 0.0
    %733 = vmatpush1.msra.mxu0 0.0
    %734 = vmatprep.subr.mxu0 0.0
    %735 = vmatpush1.msra.mxu0 0.0
    %736 = vmatprep.subr.mxu0 0.0
    %737 = vmatpush1.msra.mxu0 0.0
    %738 = vmatprep.subr.mxu0 0.0
    %739 = vmatpush1.msra.mxu0 0.0
    %740 = vmatprep.subr.mxu0 0.0
    %741 = vmatpush1.msra.mxu0 0.0
    %742 = vmatprep.subr.mxu0 0.0
    %743 = vmatpush1.msra.mxu0 0.0
    %744 = vmatprep.subr.mxu0 0.0
    %745 = vmatpush1.msra.mxu0 0.0
    %746 = vmatprep.subr.mxu0 0.0
    %747 = vmatpush1.msra.mxu0 0.0
    %748 = vmatprep.subr.mxu0 0.0
    %749 = vmatpush1.msra.mxu0 0.0
    %750 = vmatprep.subr.mxu0 0.0
    %751 = vmatpush1.msra.mxu0 0.0
    %752 = vmatprep.mubr.f32.mxu0 0.0
    %v753 = vand.u32 %v396, 4294901760
    %v754 = vsub.f32 %v396, %v753
    %v755 = vand.u32 %v754, 4294901760
    %756 = vmatmul.mubr.f32.gmra.mrb[0].mxu0 %v755
    %v757 = vpop.f32.mrb[0].mxu0
    %v758 = vadd.f32 %v677, %v757
    %v759 = vpop.f32.mrb[0].mxu0
    %760 = vdwg.mxu0
    %761 = vmatprep.subr.mxu0 0.0
    %v762 = vand.u32 %v385, 4294901760
    %v763 = vsub.f32 %v385, %v762
    %v764 = vand.u32 %v763, 4294901760
    %765 = vmatpush1.msra.mxu0 %v764
    %766 = vmatprep.subr.mxu0 0.0
    %v767 = vand.u32 %v386, 4294901760
    %v768 = vsub.f32 %v386, %v767
    %v769 = vand.u32 %v768, 4294901760
    %770 = vmatpush1.msra.mxu0 %v769
    %771 = vmatprep.subr.mxu0 0.0
    %v772 = vand.u32 %v387, 4294901760
    %v773 = vsub.f32 %v387, %v772
    %v774 = vand.u32 %v773, 4294901760
    %775 = vmatpush1.msra.mxu0 %v774
    %776 = vmatprep.subr.mxu0 0.0
    %v777 = vand.u32 %v388, 4294901760
    %v778 = vsub.f32 %v388, %v777
    %v779 = vand.u32 %v778, 4294901760
    %780 = vmatpush1.msra.mxu0 %v779
    %781 = vmatprep.subr.mxu0 0.0
    %v782 = vand.u32 %v389, 4294901760
    %v783 = vsub.f32 %v389, %v782
    %v784 = vand.u32 %v783, 4294901760
    %785 = vmatpush1.msra.mxu0 %v784
    %786 = vmatprep.subr.mxu0 0.0
    %v787 = vand.u32 %v390, 4294901760
    %v788 = vsub.f32 %v390, %v787
    %v789 = vand.u32 %v788, 4294901760
    %790 = vmatpush1.msra.mxu0 %v789
    %791 = vmatprep.subr.mxu0 0.0
    %v792 = vand.u32 %v391, 4294901760
    %v793 = vsub.f32 %v391, %v792
    %v794 = vand.u32 %v793, 4294901760
    %795 = vmatpush1.msra.mxu0 %v794
    %796 = vmatprep.subr.mxu0 0.0
    %v797 = vand.u32 %v392, 4294901760
    %v798 = vsub.f32 %v392, %v797
    %v799 = vand.u32 %v798, 4294901760
    %800 = vmatpush1.msra.mxu0 %v799
    %801 = vmatprep.subr.mxu0 0.0
    %802 = vmatpush1.msra.mxu0 0.0
    %803 = vmatprep.subr.mxu0 0.0
    %804 = vmatpush1.msra.mxu0 0.0
    %805 = vmatprep.subr.mxu0 0.0
    %806 = vmatpush1.msra.mxu0 0.0
    %807 = vmatprep.subr.mxu0 0.0
    %808 = vmatpush1.msra.mxu0 0.0
    %809 = vmatprep.subr.mxu0 0.0
    %810 = vmatpush1.msra.mxu0 0.0
    %811 = vmatprep.subr.mxu0 0.0
    %812 = vmatpush1.msra.mxu0 0.0
    %813 = vmatprep.subr.mxu0 0.0
    %814 = vmatpush1.msra.mxu0 0.0
    %815 = vmatprep.subr.mxu0 0.0
    %816 = vmatpush1.msra.mxu0 0.0
    %817 = vmatprep.subr.mxu0 0.0
    %818 = vmatpush1.msra.mxu0 0.0
    %819 = vmatprep.subr.mxu0 0.0
    %820 = vmatpush1.msra.mxu0 0.0
    %821 = vmatprep.subr.mxu0 0.0
    %822 = vmatpush1.msra.mxu0 0.0
    %823 = vmatprep.subr.mxu0 0.0
    %824 = vmatpush1.msra.mxu0 0.0
    %825 = vmatprep.subr.mxu0 0.0
    %826 = vmatpush1.msra.mxu0 0.0
    %827 = vmatprep.subr.mxu0 0.0
    %828 = vmatpush1.msra.mxu0 0.0
    %829 = vmatprep.subr.mxu0 0.0
    %830 = vmatpush1.msra.mxu0 0.0
    %831 = vmatprep.subr.mxu0 0.0
    %832 = vmatpush1.msra.mxu0 0.0
    %833 = vmatprep.subr.mxu0 0.0
    %834 = vmatpush1.msra.mxu0 0.0
    %835 = vmatprep.subr.mxu0 0.0
    %836 = vmatpush1.msra.mxu0 0.0
    %837 = vmatprep.subr.mxu0 0.0
    %838 = vmatpush1.msra.mxu0 0.0
    %839 = vmatprep.subr.mxu0 0.0
    %840 = vmatpush1.msra.mxu0 0.0
    %841 = vmatprep.subr.mxu0 0.0
    %842 = vmatpush1.msra.mxu0 0.0
    %843 = vmatprep.subr.mxu0 0.0
    %844 = vmatpush1.msra.mxu0 0.0
    %845 = vmatprep.subr.mxu0 0.0
    %846 = vmatpush1.msra.mxu0 0.0
    %847 = vmatprep.subr.mxu0 0.0
    %848 = vmatpush1.msra.mxu0 0.0
    %849 = vmatprep.mubr.f32.mxu0 0.0
    %v850 = vand.u32 %v396, 4294901760
    %851 = vmatmul.mubr.f32.gmra.mrb[0].mxu0 %v850
    %v852 = vpop.f32.mrb[0].mxu0
    %v853 = vadd.f32 %v758, %v852
    %v854 = vpop.f32.mrb[0].mxu0
    %855 = vdwg.mxu0
    %856 = vmatprep.subr.mxu0 0.0
    %v857 = vand.u32 %v385, 4294901760
    %858 = vmatpush1.msra.mxu0 %v857
    %859 = vmatprep.subr.mxu0 0.0
    %v860 = vand.u32 %v386, 4294901760
    %861 = vmatpush1.msra.mxu0 %v860
    %862 = vmatprep.subr.mxu0 0.0
    %v863 = vand.u32 %v387, 4294901760
    %864 = vmatpush1.msra.mxu0 %v863
    %865 = vmatprep.subr.mxu0 0.0
    %v866 = vand.u32 %v388, 4294901760
    %867 = vmatpush1.msra.mxu0 %v866
    %868 = vmatprep.subr.mxu0 0.0
    %v869 = vand.u32 %v389, 4294901760
    %870 = vmatpush1.msra.mxu0 %v869
    %871 = vmatprep.subr.mxu0 0.0
    %v872 = vand.u32 %v390, 4294901760
    %873 = vmatpush1.msra.mxu0 %v872
    %874 = vmatprep.subr.mxu0 0.0
    %v875 = vand.u32 %v391, 4294901760
    %876 = vmatpush1.msra.mxu0 %v875
    %877 = vmatprep.subr.mxu0 0.0
    %v878 = vand.u32 %v392, 4294901760
    %879 = vmatpush1.msra.mxu0 %v878
    %880 = vmatprep.subr.mxu0 0.0
    %881 = vmatpush1.msra.mxu0 0.0
    %882 = vmatprep.subr.mxu0 0.0
    %883 = vmatpush1.msra.mxu0 0.0
    %884 = vmatprep.subr.mxu0 0.0
    %885 = vmatpush1.msra.mxu0 0.0
    %886 = vmatprep.subr.mxu0 0.0
    %887 = vmatpush1.msra.mxu0 0.0
    %888 = vmatprep.subr.mxu0 0.0
    %889 = vmatpush1.msra.mxu0 0.0
    %890 = vmatprep.subr.mxu0 0.0
    %891 = vmatpush1.msra.mxu0 0.0
    %892 = vmatprep.subr.mxu0 0.0
    %893 = vmatpush1.msra.mxu0 0.0
    %894 = vmatprep.subr.mxu0 0.0
    %895 = vmatpush1.msra.mxu0 0.0
    %896 = vmatprep.subr.mxu0 0.0
    %897 = vmatpush1.msra.mxu0 0.0
    %898 = vmatprep.subr.mxu0 0.0
    %899 = vmatpush1.msra.mxu0 0.0
    %900 = vmatprep.subr.mxu0 0.0
    %901 = vmatpush1.msra.mxu0 0.0
    %902 = vmatprep.subr.mxu0 0.0
    %903 = vmatpush1.msra.mxu0 0.0
    %904 = vmatprep.subr.mxu0 0.0
    %905 = vmatpush1.msra.mxu0 0.0
    %906 = vmatprep.subr.mxu0 0.0
    %907 = vmatpush1.msra.mxu0 0.0
    %908 = vmatprep.subr.mxu0 0.0
    %909 = vmatpush1.msra.mxu0 0.0
    %910 = vmatprep.subr.mxu0 0.0
    %911 = vmatpush1.msra.mxu0 0.0
    %912 = vmatprep.subr.mxu0 0.0
    %913 = vmatpush1.msra.mxu0 0.0
    %914 = vmatprep.subr.mxu0 0.0
    %915 = vmatpush1.msra.mxu0 0.0
    %916 = vmatprep.subr.mxu0 0.0
    %917 = vmatpush1.msra.mxu0 0.0
    %918 = vmatprep.subr.mxu0 0.0
    %919 = vmatpush1.msra.mxu0 0.0
    %920 = vmatprep.subr.mxu0 0.0
    %921 = vmatpush1.msra.mxu0 0.0
    %922 = vmatprep.subr.mxu0 0.0
    %923 = vmatpush1.msra.mxu0 0.0
    %924 = vmatprep.subr.mxu0 0.0
    %925 = vmatpush1.msra.mxu0 0.0
    %926 = vmatprep.subr.mxu0 0.0
    %927 = vmatpush1.msra.mxu0 0.0
    %928 = vmatprep.mubr.f32.mxu0 0.0
    %v929 = vand.u32 %v396, 4294901760
    %930 = vmatmul.mubr.f32.gmra.mrb[0].mxu0 %v929
    %v931 = vpop.f32.mrb[0].mxu0
    %v932 = vadd.f32 %v853, %v931
    %v933 = vpop.f32.mrb[0].mxu0
    %934 = vdwg.mxu0
    %v935 = vmax.f32 %v932, 0.0
    %vm936 = vcmask 31744
    %v938 = vsel %vm936, %v935, 0
    %vm940 = vcmask 1043456
    %v942 = vsel %vm940, %v393, 0
    %944 = vmatprep.subr.mxu0 0.0
    %v945 = vand.u32 %v942, 4294901760
    %946 = vmatpush1.msra.mxu0 %v945
    %947 = vmatprep.subr.mxu0 0.0
    %948 = vmatpush1.msra.mxu0 0.0
    %949 = vmatprep.subr.mxu0 0.0
    %950 = vmatpush1.msra.mxu0 0.0
    %951 = vmatprep.subr.mxu0 0.0
    %952 = vmatpush1.msra.mxu0 0.0
    %953 = vmatprep.subr.mxu0 0.0
    %954 = vmatpush1.msra.mxu0 0.0
    %955 = vmatprep.subr.mxu0 0.0
    %956 = vmatpush1.msra.mxu0 0.0
    %957 = vmatprep.subr.mxu0 0.0
    %958 = vmatpush1.msra.mxu0 0.0
    %959 = vmatprep.subr.mxu0 0.0
    %960 = vmatpush1.msra.mxu0 0.0
    %961 = vmatprep.subr.mxu0 0.0
    %962 = vmatpush1.msra.mxu0 0.0
    %963 = vmatprep.subr.mxu0 0.0
    %964 = vmatpush1.msra.mxu0 0.0
    %965 = vmatprep.subr.mxu0 0.0
    %966 = vmatpush1.msra.mxu0 0.0
    %967 = vmatprep.subr.mxu0 0.0
    %968 = vmatpush1.msra.mxu0 0.0
    %969 = vmatprep.subr.mxu0 0.0
    %970 = vmatpush1.msra.mxu0 0.0
    %971 = vmatprep.subr.mxu0 0.0
    %972 = vmatpush1.msra.mxu0 0.0
    %973 = vmatprep.subr.mxu0 0.0
    %974 = vmatpush1.msra.mxu0 0.0
    %975 = vmatprep.subr.mxu0 0.0
    %976 = vmatpush1.msra.mxu0 0.0
    %977 = vmatprep.subr.mxu0 0.0
    %978 = vmatpush1.msra.mxu0 0.0
    %979 = vmatprep.subr.mxu0 0.0
    %980 = vmatpush1.msra.mxu0 0.0
    %981 = vmatprep.subr.mxu0 0.0
    %982 = vmatpush1.msra.mxu0 0.0
    %983 = vmatprep.subr.mxu0 0.0
    %984 = vmatpush1.msra.mxu0 0.0
    %985 = vmatprep.subr.mxu0 0.0
    %986 = vmatpush1.msra.mxu0 0.0
    %987 = vmatprep.subr.mxu0 0.0
    %988 = vmatpush1.msra.mxu0 0.0
    %989 = vmatprep.subr.mxu0 0.0
    %990 = vmatpush1.msra.mxu0 0.0
    %991 = vmatprep.subr.mxu0 0.0
    %992 = vmatpush1.msra.mxu0 0.0
    %993 = vmatprep.subr.mxu0 0.0
    %994 = vmatpush1.msra.mxu0 0.0
    %995 = vmatprep.subr.mxu0 0.0
    %996 = vmatpush1.msra.mxu0 0.0
    %997 = vmatprep.subr.mxu0 0.0
    %998 = vmatpush1.msra.mxu0 0.0
    %999 = vmatprep.subr.mxu0 0.0
    %1000 = vmatpush1.msra.mxu0 0.0
    %1001 = vmatprep.subr.mxu0 0.0
    %1002 = vmatpush1.msra.mxu0 0.0
    %1003 = vmatprep.subr.mxu0 0.0
    %1004 = vmatpush1.msra.mxu0 0.0
    %1005 = vmatprep.subr.mxu0 0.0
    %1006 = vmatpush1.msra.mxu0 0.0
    %1007 = vmatprep.subr.mxu0 0.0
    %1008 = vmatpush1.msra.mxu0 0.0
    %1009 = vmatprep.mubr.f32.mxu0 0.0
    %v1010 = vand.u32 %v938, 4294901760
    %v1011 = vsub.f32 %v938, %v1010
    %v1012 = vand.u32 %v1011, 4294901760
    %v1013 = vsub.f32 %v1011, %v1012
    %v1014 = vand.u32 %v1013, 4294901760
    %1015 = vmatmul.mubr.f32.gmra.mrb[0].mxu0 %v1014
    %v1016 = vpop.f32.mrb[0].mxu0
    %v1017 = vadd.f32 0.0, %v1016
    %v1018 = vpop.f32.mrb[0].mxu0
    %1019 = vdwg.mxu0
    %1020 = vmatprep.subr.mxu0 0.0
    %v1021 = vand.u32 %v942, 4294901760
    %v1022 = vsub.f32 %v942, %v1021
    %v1023 = vand.u32 %v1022, 4294901760
    %v1024 = vsub.f32 %v1022, %v1023
    %v1025 = vand.u32 %v1024, 4294901760
    %1026 = vmatpush1.msra.mxu0 %v1025
    %1027 = vmatprep.subr.mxu0 0.0
    %1028 = vmatpush1.msra.mxu0 0.0
    %1029 = vmatprep.subr.mxu0 0.0
    %1030 = vmatpush1.msra.mxu0 0.0
    %1031 = vmatprep.subr.mxu0 0.0
    %1032 = vmatpush1.msra.mxu0 0.0
    %1033 = vmatprep.subr.mxu0 0.0
    %1034 = vmatpush1.msra.mxu0 0.0
    %1035 = vmatprep.subr.mxu0 0.0
    %1036 = vmatpush1.msra.mxu0 0.0
    %1037 = vmatprep.subr.mxu0 0.0
    %1038 = vmatpush1.msra.mxu0 0.0
    %1039 = vmatprep.subr.mxu0 0.0
    %1040 = vmatpush1.msra.mxu0 0.0
    %1041 = vmatprep.subr.mxu0 0.0
    %1042 = vmatpush1.msra.mxu0 0.0
    %1043 = vmatprep.subr.mxu0 0.0
    %1044 = vmatpush1.msra.mxu0 0.0
    %1045 = vmatprep.subr.mxu0 0.0
    %1046 = vmatpush1.msra.mxu0 0.0
    %1047 = vmatprep.subr.mxu0 0.0
    %1048 = vmatpush1.msra.mxu0 0.0
    %1049 = vmatprep.subr.mxu0 0.0
    %1050 = vmatpush1.msra.mxu0 0.0
    %1051 = vmatprep.subr.mxu0 0.0
    %1052 = vmatpush1.msra.mxu0 0.0
    %1053 = vmatprep.subr.mxu0 0.0
    %1054 = vmatpush1.msra.mxu0 0.0
    %1055 = vmatprep.subr.mxu0 0.0
    %1056 = vmatpush1.msra.mxu0 0.0
    %1057 = vmatprep.subr.mxu0 0.0
    %1058 = vmatpush1.msra.mxu0 0.0
    %1059 = vmatprep.subr.mxu0 0.0
    %1060 = vmatpush1.msra.mxu0 0.0
    %1061 = vmatprep.subr.mxu0 0.0
    %1062 = vmatpush1.msra.mxu0 0.0
    %1063 = vmatprep.subr.mxu0 0.0
    %1064 = vmatpush1.msra.mxu0 0.0
    %1065 = vmatprep.subr.mxu0 0.0
    %1066 = vmatpush1.msra.mxu0 0.0
    %1067 = vmatprep.subr.mxu0 0.0
    %1068 = vmatpush1.msra.mxu0 0.0
    %1069 = vmatprep.subr.mxu0 0.0
    %1070 = vmatpush1.msra.mxu0 0.0
    %1071 = vmatprep.subr.mxu0 0.0
    %1072 = vmatpush1.msra.mxu0 0.0
    %1073 = vmatprep.subr.mxu0 0.0
    %1074 = vmatpush1.msra.mxu0 0.0
    %1075 = vmatprep.subr.mxu0 0.0
    %1076 = vmatpush1.msra.mxu0 0.0
    %1077 = vmatprep.subr.mxu0 0.0
    %1078 = vmatpush1.msra.mxu0 0.0
    %1079 = vmatprep.subr.mxu0 0.0
    %1080 = vmatpush1.msra.mxu0 0.0
    %1081 = vmatprep.subr.mxu0 0.0
    %1082 = vmatpush1.msra.mxu0 0.0
    %1083 = vmatprep.subr.mxu0 0.0
    %1084 = vmatpush1.msra.mxu0 0.0
    %1085 = vmatprep.subr.mxu0 0.0
    %1086 = vmatpush1.msra.mxu0 0.0
    %1087 = vmatprep.subr.mxu0 0.0
    %1088 = vmatpush1.msra.mxu0 0.0
    %1089 = vmatprep.mubr.f32.mxu0 0.0
    %v1090 = vand.u32 %v938, 4294901760
    %1091 = vmatmul.mubr.f32.gmra.mrb[0].mxu0 %v1090
    %v1092 = vpop.f32.mrb[0].mxu0
    %v1093 = vadd.f32 %v1017, %v1092
    %v1094 = vpop.f32.mrb[0].mxu0
    %1095 = vdwg.mxu0
    %1096 = vmatprep.subr.mxu0 0.0
    %v1097 = vand.u32 %v942, 4294901760
    %v1098 = vsub.f32 %v942, %v1097
    %1099 = vmatpush1.msra.mxu0 %v1098
    %1100 = vmatprep.subr.mxu0 0.0
    %1101 = vmatpush1.msra.mxu0 0.0
    %1102 = vmatprep.subr.mxu0 0.0
    %1103 = vmatpush1.msra.mxu0 0.0
    %1104 = vmatprep.subr.mxu0 0.0
    %1105 = vmatpush1.msra.mxu0 0.0
    %1106 = vmatprep.subr.mxu0 0.0
    %1107 = vmatpush1.msra.mxu0 0.0
    %1108 = vmatprep.subr.mxu0 0.0
    %1109 = vmatpush1.msra.mxu0 0.0
    %1110 = vmatprep.subr.mxu0 0.0
    %1111 = vmatpush1.msra.mxu0 0.0
    %1112 = vmatprep.subr.mxu0 0.0
    %1113 = vmatpush1.msra.mxu0 0.0
    %1114 = vmatprep.subr.mxu0 0.0
    %1115 = vmatpush1.msra.mxu0 0.0
    %1116 = vmatprep.subr.mxu0 0.0
    %1117 = vmatpush1.msra.mxu0 0.0
    %1118 = vmatprep.subr.mxu0 0.0
    %1119 = vmatpush1.msra.mxu0 0.0
    %1120 = vmatprep.subr.mxu0 0.0
    %1121 = vmatpush1.msra.mxu0 0.0
    %1122 = vmatprep.subr.mxu0 0.0
    %1123 = vmatpush1.msra.mxu0 0.0
    %1124 = vmatprep.subr.mxu0 0.0
    %1125 = vmatpush1.msra.mxu0 0.0
    %1126 = vmatprep.subr.mxu0 0.0
    %1127 = vmatpush1.msra.mxu0 0.0
    %1128 = vmatprep.subr.mxu0 0.0
    %1129 = vmatpush1.msra.mxu0 0.0
    %1130 = vmatprep.subr.mxu0 0.0
    %1131 = vmatpush1.msra.mxu0 0.0
    %1132 = vmatprep.subr.mxu0 0.0
    %1133 = vmatpush1.msra.mxu0 0.0
    %1134 = vmatprep.subr.mxu0 0.0
    %1135 = vmatpush1.msra.mxu0 0.0
    %1136 = vmatprep.subr.mxu0 0.0
    %1137 = vmatpush1.msra.mxu0 0.0
    %1138 = vmatprep.subr.mxu0 0.0
    %1139 = vmatpush1.msra.mxu0 0.0
    %1140 = vmatprep.subr.mxu0 0.0
    %1141 = vmatpush1.msra.mxu0 0.0
    %1142 = vmatprep.subr.mxu0 0.0
    %1143 = vmatpush1.msra.mxu0 0.0
    %1144 = vmatprep.subr.mxu0 0.0
    %1145 = vmatpush1.msra.mxu0 0.0
    %1146 = vmatprep.subr.mxu0 0.0
    %1147 = vmatpush1.msra.mxu0 0.0
    %1148 = vmatprep.subr.mxu0 0.0
    %1149 = vmatpush1.msra.mxu0 0.0
    %1150 = vmatprep.subr.mxu0 0.0
    %1151 = vmatpush1.msra.mxu0 0.0
    %1152 = vmatprep.subr.mxu0 0.0
    %1153 = vmatpush1.msra.mxu0 0.0
    %1154 = vmatprep.subr.mxu0 0.0
    %1155 = vmatpush1.msra.mxu0 0.0
    %1156 = vmatprep.subr.mxu0 0.0
    %1157 = vmatpush1.msra.mxu0 0.0
    %1158 = vmatprep.subr.mxu0 0.0
    %1159 = vmatpush1.msra.mxu0 0.0
    %1160 = vmatprep.subr.mxu0 0.0
    %1161 = vmatpush1.msra.mxu0 0.0
    %1162 = vmatprep.mubr.f32.mxu0 0.0
    %v1163 = vand.u32 %v938, 4294901760
    %v1164 = vsub.f32 %v938, %v1163
    %1165 = vmatmul.mubr.f32.gmra.mrb[0].mxu0 %v1164
    %v1166 = vpop.f32.mrb[0].mxu0
    %v1167 = vadd.f32 %v1093, %v1166
    %v1168 = vpop.f32.mrb[0].mxu0
    %1169 = vdwg.mxu0
    %1170 = vmatprep.subr.mxu0 0.0
    %v1171 = vand.u32 %v942, 4294901760
    %1172 = vmatpush1.msra.mxu0 %v1171
    %1173 = vmatprep.subr.mxu0 0.0
    %1174 = vmatpush1.msra.mxu0 0.0
    %1175 = vmatprep.subr.mxu0 0.0
    %1176 = vmatpush1.msra.mxu0 0.0
    %1177 = vmatprep.subr.mxu0 0.0
    %1178 = vmatpush1.msra.mxu0 0.0
    %1179 = vmatprep.subr.mxu0 0.0
    %1180 = vmatpush1.msra.mxu0 0.0
    %1181 = vmatprep.subr.mxu0 0.0
    %1182 = vmatpush1.msra.mxu0 0.0
    %1183 = vmatprep.subr.mxu0 0.0
    %1184 = vmatpush1.msra.mxu0 0.0
    %1185 = vmatprep.subr.mxu0 0.0
    %1186 = vmatpush1.msra.mxu0 0.0
    %1187 = vmatprep.subr.mxu0 0.0
    %1188 = vmatpush1.msra.mxu0 0.0
    %1189 = vmatprep.subr.mxu0 0.0
    %1190 = vmatpush1.msra.mxu0 0.0
    %1191 = vmatprep.subr.mxu0 0.0
    %1192 = vmatpush1.msra.mxu0 0.0
    %1193 = vmatprep.subr.mxu0 0.0
    %1194 = vmatpush1.msra.mxu0 0.0
    %1195 = vmatprep.subr.mxu0 0.0
    %1196 = vmatpush1.msra.mxu0 0.0
    %1197 = vmatprep.subr.mxu0 0.0
    %1198 = vmatpush1.msra.mxu0 0.0
    %1199 = vmatprep.subr.mxu0 0.0
    %1200 = vmatpush1.msra.mxu0 0.0
    %1201 = vmatprep.subr.mxu0 0.0
    %1202 = vmatpush1.msra.mxu0 0.0
    %1203 = vmatprep.subr.mxu0 0.0
    %1204 = vmatpush1.msra.mxu0 0.0
    %1205 = vmatprep.subr.mxu0 0.0
    %1206 = vmatpush1.msra.mxu0 0.0
    %1207 = vmatprep.subr.mxu0 0.0
    %1208 = vmatpush1.msra.mxu0 0.0
    %1209 = vmatprep.subr.mxu0 0.0
    %1210 = vmatpush1.msra.mxu0 0.0
    %1211 = vmatprep.subr.mxu0 0.0
    %1212 = vmatpush1.msra.mxu0 0.0
    %1213 = vmatprep.subr.mxu0 0.0
    %1214 = vmatpush1.msra.mxu0 0.0
    %1215 = vmatprep.subr.mxu0 0.0
    %1216 = vmatpush1.msra.mxu0 0.0
    %1217 = vmatprep.subr.mxu0 0.0
    %1218 = vmatpush1.msra.mxu0 0.0
    %1219 = vmatprep.subr.mxu0 0.0
    %1220 = vmatpush1.msra.mxu0 0.0
    %1221 = vmatprep.subr.mxu0 0.0
    %1222 = vmatpush1.msra.mxu0 0.0
    %1223 = vmatprep.subr.mxu0 0.0
    %1224 = vmatpush1.msra.mxu0 0.0
    %1225 = vmatprep.subr.mxu0 0.0
    %1226 = vmatpush1.msra.mxu0 0.0
    %1227 = vmatprep.subr.mxu0 0.0
    %1228 = vmatpush1.msra.mxu0 0.0
    %1229 = vmatprep.subr.mxu0 0.0
    %1230 = vmatpush1.msra.mxu0 0.0
    %1231 = vmatprep.subr.mxu0 0.0
    %1232 = vmatpush1.msra.mxu0 0.0
    %1233 = vmatprep.subr.mxu0 0.0
    %1234 = vmatpush1.msra.mxu0 0.0
    %1235 = vmatprep.mubr.f32.mxu0 0.0
    %v1236 = vand.u32 %v938, 4294901760
    %v1237 = vsub.f32 %v938, %v1236
    %v1238 = vand.u32 %v1237, 4294901760
    %1239 = vmatmul.mubr.f32.gmra.mrb[0].mxu0 %v1238
    %v1240 = vpop.f32.mrb[0].mxu0
    %v1241 = vadd.f32 %v1167, %v1240
    %v1242 = vpop.f32.mrb[0].mxu0
    %1243 = vdwg.mxu0
    %1244 = vmatprep.subr.mxu0 0.0
    %v1245 = vand.u32 %v942, 4294901760
    %v1246 = vsub.f32 %v942, %v1245
    %v1247 = vand.u32 %v1246, 4294901760
    %1248 = vmatpush1.msra.mxu0 %v1247
    %1249 = vmatprep.subr.mxu0 0.0
    %1250 = vmatpush1.msra.mxu0 0.0
    %1251 = vmatprep.subr.mxu0 0.0
    %1252 = vmatpush1.msra.mxu0 0.0
    %1253 = vmatprep.subr.mxu0 0.0
    %1254 = vmatpush1.msra.mxu0 0.0
    %1255 = vmatprep.subr.mxu0 0.0
    %1256 = vmatpush1.msra.mxu0 0.0
    %1257 = vmatprep.subr.mxu0 0.0
    %1258 = vmatpush1.msra.mxu0 0.0
    %1259 = vmatprep.subr.mxu0 0.0
    %1260 = vmatpush1.msra.mxu0 0.0
    %1261 = vmatprep.subr.mxu0 0.0
    %1262 = vmatpush1.msra.mxu0 0.0
    %1263 = vmatprep.subr.mxu0 0.0
    %1264 = vmatpush1.msra.mxu0 0.0
    %1265 = vmatprep.subr.mxu0 0.0
    %1266 = vmatpush1.msra.mxu0 0.0
    %1267 = vmatprep.subr.mxu0 0.0
    %1268 = vmatpush1.msra.mxu0 0.0
    %1269 = vmatprep.subr.mxu0 0.0
    %1270 = vmatpush1.msra.mxu0 0.0
    %1271 = vmatprep.subr.mxu0 0.0
    %1272 = vmatpush1.msra.mxu0 0.0
    %1273 = vmatprep.subr.mxu0 0.0
    %1274 = vmatpush1.msra.mxu0 0.0
    %1275 = vmatprep.subr.mxu0 0.0
    %1276 = vmatpush1.msra.mxu0 0.0
    %1277 = vmatprep.subr.mxu0 0.0
    %1278 = vmatpush1.msra.mxu0 0.0
    %1279 = vmatprep.subr.mxu0 0.0
    %1280 = vmatpush1.msra.mxu0 0.0
    %1281 = vmatprep.subr.mxu0 0.0
    %1282 = vmatpush1.msra.mxu0 0.0
    %1283 = vmatprep.subr.mxu0 0.0
    %1284 = vmatpush1.msra.mxu0 0.0
    %1285 = vmatprep.subr.mxu0 0.0
    %1286 = vmatpush1.msra.mxu0 0.0
    %1287 = vmatprep.subr.mxu0 0.0
    %1288 = vmatpush1.msra.mxu0 0.0
    %1289 = vmatprep.subr.mxu0 0.0
    %1290 = vmatpush1.msra.mxu0 0.0
    %1291 = vmatprep.subr.mxu0 0.0
    %1292 = vmatpush1.msra.mxu0 0.0
    %1293 = vmatprep.subr.mxu0 0.0
    %1294 = vmatpush1.msra.mxu0 0.0
    %1295 = vmatprep.subr.mxu0 0.0
    %1296 = vmatpush1.msra.mxu0 0.0
    %1297 = vmatprep.subr.mxu0 0.0
    %1298 = vmatpush1.msra.mxu0 0.0
    %1299 = vmatprep.subr.mxu0 0.0
    %1300 = vmatpush1.msra.mxu0 0.0
    %1301 = vmatprep.subr.mxu0 0.0
    %1302 = vmatpush1.msra.mxu0 0.0
    %1303 = vmatprep.subr.mxu0 0.0
    %1304 = vmatpush1.msra.mxu0 0.0
    %1305 = vmatprep.subr.mxu0 0.0
    %1306 = vmatpush1.msra.mxu0 0.0
    %1307 = vmatprep.subr.mxu0 0.0
    %1308 = vmatpush1.msra.mxu0 0.0
    %1309 = vmatprep.subr.mxu0 0.0
    %1310 = vmatpush1.msra.mxu0 0.0
    %1311 = vmatprep.mubr.f32.mxu0 0.0
    %v1312 = vand.u32 %v938, 4294901760
    %1313 = vmatmul.mubr.f32.gmra.mrb[0].mxu0 %v1312
    %v1314 = vpop.f32.mrb[0].mxu0
    %v1315 = vadd.f32 %v1241, %v1314
    %v1316 = vpop.f32.mrb[0].mxu0
    %1317 = vdwg.mxu0
    %1318 = vmatprep.subr.mxu0 0.0
    %v1319 = vand.u32 %v942, 4294901760
    %1320 = vmatpush1.msra.mxu0 %v1319
    %1321 = vmatprep.subr.mxu0 0.0
    %1322 = vmatpush1.msra.mxu0 0.0
    %1323 = vmatprep.subr.mxu0 0.0
    %1324 = vmatpush1.msra.mxu0 0.0
    %1325 = vmatprep.subr.mxu0 0.0
    %1326 = vmatpush1.msra.mxu0 0.0
    %1327 = vmatprep.subr.mxu0 0.0
    %1328 = vmatpush1.msra.mxu0 0.0
    %1329 = vmatprep.subr.mxu0 0.0
    %1330 = vmatpush1.msra.mxu0 0.0
    %1331 = vmatprep.subr.mxu0 0.0
    %1332 = vmatpush1.msra.mxu0 0.0
    %1333 = vmatprep.subr.mxu0 0.0
    %1334 = vmatpush1.msra.mxu0 0.0
    %1335 = vmatprep.subr.mxu0 0.0
    %1336 = vmatpush1.msra.mxu0 0.0
    %1337 = vmatprep.subr.mxu0 0.0
    %1338 = vmatpush1.msra.mxu0 0.0
    %1339 = vmatprep.subr.mxu0 0.0
    %1340 = vmatpush1.msra.mxu0 0.0
    %1341 = vmatprep.subr.mxu0 0.0
    %1342 = vmatpush1.msra.mxu0 0.0
    %1343 = vmatprep.subr.mxu0 0.0
    %1344 = vmatpush1.msra.mxu0 0.0
    %1345 = vmatprep.subr.mxu0 0.0
    %1346 = vmatpush1.msra.mxu0 0.0
    %1347 = vmatprep.subr.mxu0 0.0
    %1348 = vmatpush1.msra.mxu0 0.0
    %1349 = vmatprep.subr.mxu0 0.0
    %1350 = vmatpush1.msra.mxu0 0.0
    %1351 = vmatprep.subr.mxu0 0.0
    %1352 = vmatpush1.msra.mxu0 0.0
    %1353 = vmatprep.subr.mxu0 0.0
    %1354 = vmatpush1.msra.mxu0 0.0
    %1355 = vmatprep.subr.mxu0 0.0
    %1356 = vmatpush1.msra.mxu0 0.0
    %1357 = vmatprep.subr.mxu0 0.0
    %1358 = vmatpush1.msra.mxu0 0.0
    %1359 = vmatprep.subr.mxu0 0.0
    %1360 = vmatpush1.msra.mxu0 0.0
    %1361 = vmatprep.subr.mxu0 0.0
    %1362 = vmatpush1.msra.mxu0 0.0
    %1363 = vmatprep.subr.mxu0 0.0
    %1364 = vmatpush1.msra.mxu0 0.0
    %1365 = vmatprep.subr.mxu0 0.0
    %1366 = vmatpush1.msra.mxu0 0.0
    %1367 = vmatprep.subr.mxu0 0.0
    %1368 = vmatpush1.msra.mxu0 0.0
    %1369 = vmatprep.subr.mxu0 0.0
    %1370 = vmatpush1.msra.mxu0 0.0
    %1371 = vmatprep.subr.mxu0 0.0
    %1372 = vmatpush1.msra.mxu0 0.0
    %1373 = vmatprep.subr.mxu0 0.0
    %1374 = vmatpush1.msra.mxu0 0.0
    %1375 = vmatprep.subr.mxu0 0.0
    %1376 = vmatpush1.msra.mxu0 0.0
    %1377 = vmatprep.subr.mxu0 0.0
    %1378 = vmatpush1.msra.mxu0 0.0
    %1379 = vmatprep.subr.mxu0 0.0
    %1380 = vmatpush1.msra.mxu0 0.0
    %1381 = vmatprep.subr.mxu0 0.0
    %1382 = vmatpush1.msra.mxu0 0.0
    %1383 = vmatprep.mubr.f32.mxu0 0.0
    %v1384 = vand.u32 %v938, 4294901760
    %1385 = vmatmul.mubr.f32.gmra.mrb[0].mxu0 %v1384
    %v1386 = vpop.f32.mrb[0].mxu0
    %v1387 = vadd.f32 %v1315, %v1386
    %v1388 = vpop.f32.mrb[0].mxu0
    %1389 = vdwg.mxu0
    %v1391 = vrot.slane %v1387, 2
    %v1393 = vadd.f32 %v1387, %v1391
    %v1394 = vxor.u32 %v1393, 2147483648
    %v1395 = vmul.f32 %v1394, 1.442695
    %v1396 = vpow.pop %v1395
    %v1397 = vadd.f32 %v1396, 1.0
    %v1398 = vrcp.pop %v1397
    %v1399 = vmul.f32 1.0, %v1398
    %vm1400 = vcmask 516096
    %1401 = vst.msk [vmem:[#allocation5] sm:$0x1] %vm1400, %v1399
    %s1402 = scalar_lea.vmem [#allocation5], 1
    %vm1403 = vcmask 517121
    %1404 = vst.msk [vmem:[%s1402 - $0x1] sm:$0x2] %vm1403, %v1399
    // Predicated region
    $region18: #{tpu_custom_call.1} parent=1 // pred_check
      _
    $region19: #{tpu_custom_call.1} parent=1 // pred_check_branch
      %1406 = sbr.rel (0) target = $region21
    $region20: #{tpu_custom_call.1} parent=1 // pred_region
      %s1408 = ssub.s32 32, 32
      %1409 = vsyncadd [#allocation4], %s1408
      %s1410 = sshll.u32 [#allocation5], 4
      %s1411 = int_to_ptr.vmem [resolvable:$true] %s1410
      %1416 = dma.vmem_to_hbm [thread:$0]  %s1411, 32, %s3, [#allocation4], 16, 16, 1
    $region21: #{tpu_custom_call.1} parent=1 // pred_fallthru
      _
    // Predicated region
    $region22: #{tpu_custom_call.1} parent=1 // pred_check
      _
    $region23: #{tpu_custom_call.1} parent=1 // pred_check_branch
      %1418 = sbr.rel (0) target = $region25
    $region24: #{tpu_custom_call.1} parent=1 // pred_region
      %1419 = dma.done [#allocation4], 32
    $region25: #{tpu_custom_call.1} parent=1 // pred_fallthru
      _
    %1420 = vsyncpa [#allocation3], 1
    %1421 = vsyncpa [#allocation4], 1

</llo_original>
